<compile_context>
chip_gen: v7x
topology: tpu7x:2x2x1
jax: 0.10.0
libtpu: 0.0.40
codegen_flags: <defaults>
</compile_context>

<pallas_src>
import jax
import jax.numpy as jnp
from jax.experimental import pallas as pl
from jax.experimental.pallas import tpu as pltpu


def mlp_kernel(xt_ref, w1_ref, b1_ref, w2_ref, b2_ref, o_ref):
    # fc1: (64, 15) @ (15, TB) -> (64, TB), bias broadcast over lanes, ReLU.
    h = jnp.dot(w1_ref[...], xt_ref[...], preferred_element_type=jnp.float32)
    h = h + b1_ref[...]                    # (64, 1) broadcasts over TB lanes
    h = jnp.maximum(h, 0.0)
    # fc2 as VPU multiply + sublane reduce (avoids an N=1 MXU matmul):
    #   y[b] = sum_k h[k, b] * w2[k]  -> (1, TB)
    y = jnp.sum(h * w2_ref[...], axis=0, keepdims=True)
    y = y + b2_ref[0, 0]                   # scalar bias from SMEM
    o_ref[...] = jnp.tanh(y).astype(o_ref.dtype)


def mlp_forward(x, w1, b1, w2, b2, *, tb=512):
    """x: (B, 15) f32, PyTorch-layout params:
       w1: (64, 15), b1: (64,), w2: (1, 64), b2: (1,).  Returns (B, 1) f32."""
    B = x.shape[0]
    n_tiles = pl.cdiv(B, tb)
    Bp = n_tiles * tb

    # Transpose to batch-on-lanes layout and zero-pad the batch to a tile multiple.
    xt = jnp.zeros((15, Bp), jnp.float32).at[:, :B].set(x.T.astype(jnp.float32))
    b1_col = b1.reshape(64, 1).astype(jnp.float32)
    w2_col = w2.reshape(64, 1).astype(jnp.float32)      # (1,64) -> (64,1)
    b2_s = b2.reshape(1, 1).astype(jnp.float32)

    yt = pl.pallas_call(
        mlp_kernel,
        out_shape=jax.ShapeDtypeStruct((1, Bp), jnp.float32),
        grid=(n_tiles,),
        in_specs=[
            pl.BlockSpec((15, tb), lambda i: (0, i)),          # streaming x tile
            pl.BlockSpec((64, 15), lambda i: (0, 0)),          # resident W1
            pl.BlockSpec((64, 1), lambda i: (0, 0)),           # resident b1
            pl.BlockSpec((64, 1), lambda i: (0, 0)),           # resident w2 column
            pl.BlockSpec(memory_space=pltpu.MemorySpace.SMEM), # b2 scalar
        ],
        out_specs=pl.BlockSpec((1, tb), lambda i: (0, i)),     # lane-dense output
        compiler_params=pltpu.CompilerParams(
            dimension_semantics=("parallel",),
        ),
    )(xt, w1.astype(jnp.float32), b1_col, w2_col, b2_s)

    return yt[0, :B].reshape(B, 1)


def init_params(key):
    """Deterministic init mimicking nn.Linear defaults, in PyTorch (out, in) layout."""
    k1, k2, k3, k4 = jax.random.split(key, 4)
    lim1 = 1.0 / jnp.sqrt(15.0)
    lim2 = 1.0 / jnp.sqrt(64.0)
    w1 = jax.random.uniform(k1, (64, 15), jnp.float32, -lim1, lim1)
    b1 = jax.random.uniform(k2, (64,), jnp.float32, -lim1, lim1)
    w2 = jax.random.uniform(k3, (1, 64), jnp.float32, -lim2, lim2)
    b2 = jax.random.uniform(k4, (1,), jnp.float32, -lim2, lim2)
    return w1, b1, w2, b2


if __name__ == "__main__":
    key = jax.random.PRNGKey(0)
    kx, kp = jax.random.split(key)

    B = 8
    x = jax.random.normal(kx, (B, 15), jnp.float32)
    w1, b1, w2, b2 = init_params(kp)

    out = mlp_forward(x, w1, b1, w2, b2)
    out = jax.block_until_ready(out)

    # Reference check in plain JAX (PyTorch layout: y = x @ W^T + b).
    ref = jnp.tanh(jnp.maximum(x @ w1.T + b1, 0.0) @ w2.T + b2)
    assert out.shape == (B, 1)
    assert jnp.allclose(out, ref, atol=1e-5), "mismatch vs reference"

    print("KERNEL_OK")
</pallas_src>

<mosaic_0001>
module attributes {stable_mosaic.version = 11 : i64} {
  func.func @mlp_kernel(%arg0: i32, %arg1: memref<15x512xf32, #tpu.memory_space<vmem>>, %arg2: memref<64x15xf32, #tpu.memory_space<vmem>>, %arg3: memref<64x1xf32, #tpu.memory_space<vmem>>, %arg4: memref<64x1xf32, #tpu.memory_space<vmem>>, %arg5: memref<1x1xf32, #tpu.memory_space<smem>>, %arg6: memref<1x512xf32, #tpu.memory_space<vmem>>) attributes {dimension_semantics = [#tpu.dimension_semantics<parallel>], iteration_bounds = array<i64: 1>, scalar_prefetch = 0 : i64, scratch_operands = 0 : i64, tpu.core_type = #tpu.core_type<tc>, window_params = [{transform_indices = @transform_0, window_bounds = array<i64: 15, 512>}, {pipeline_mode = #tpu.pipeline_mode<synchronous>, transform_indices = @transform_1, window_bounds = array<i64: 64, 15>}, {pipeline_mode = #tpu.pipeline_mode<synchronous>, transform_indices = @transform_2, window_bounds = array<i64: 64, 1>}, {pipeline_mode = #tpu.pipeline_mode<synchronous>, transform_indices = @transform_3, window_bounds = array<i64: 64, 1>}, {transform_indices = @transform_4, window_bounds = array<i64: 1, 1>}, {transform_indices = @transform_5, window_bounds = array<i64: 1, 512>}]} {
    %c0 = arith.constant 0 : index
    %c0_0 = arith.constant 0 : index
    %0 = vector.load %arg2[%c0, %c0_0] : memref<64x15xf32, #tpu.memory_space<vmem>>, vector<64x15xf32>
    %c0_1 = arith.constant 0 : index
    %c0_2 = arith.constant 0 : index
    %1 = vector.load %arg1[%c0_1, %c0_2] : memref<15x512xf32, #tpu.memory_space<vmem>>, vector<15x512xf32>
    %cst = arith.constant dense<0.000000e+00> : vector<64x512xf32>
    %2 = tpu.matmul %0, %1, %cst {dimension_numbers = #tpu.dot_dimension_numbers<[1], [0], [0], [1], [0, 0, 1, 1], [], []>} : vector<64x15xf32>, vector<15x512xf32>, vector<64x512xf32> -> vector<64x512xf32>
    %c0_3 = arith.constant 0 : index
    %c0_4 = arith.constant 0 : index
    %3 = vector.load %arg3[%c0_3, %c0_4] : memref<64x1xf32, #tpu.memory_space<vmem>>, vector<64x1xf32>
    %4 = vector.broadcast %3 : vector<64x1xf32> to vector<64x512xf32>
    %5 = arith.addf %2, %4 : vector<64x512xf32>
    %cst_5 = arith.constant 0.000000e+00 : f32
    %6 = vector.broadcast %cst_5 : f32 to vector<64x512xf32>
    %7 = arith.maximumf %5, %6 : vector<64x512xf32>
    %c0_6 = arith.constant 0 : index
    %c0_7 = arith.constant 0 : index
    %8 = vector.load %arg4[%c0_6, %c0_7] : memref<64x1xf32, #tpu.memory_space<vmem>>, vector<64x1xf32>
    %9 = vector.broadcast %8 : vector<64x1xf32> to vector<64x512xf32>
    %10 = arith.mulf %7, %9 : vector<64x512xf32>
    %cst_8 = arith.constant dense<0.000000e+00> : vector<512xf32>
    %11 = vector.multi_reduction <add>, %10, %cst_8 [0] : vector<64x512xf32> to vector<512xf32>
    %12 = vector.shape_cast %11 : vector<512xf32> to vector<1x512xf32>
    %c0_9 = arith.constant 0 : index
    %c0_10 = arith.constant 0 : index
    %13 = memref.load %arg5[%c0_9, %c0_10] : memref<1x1xf32, #tpu.memory_space<smem>>
    %14 = vector.broadcast %13 : f32 to vector<1x512xf32>
    %15 = arith.addf %12, %14 : vector<1x512xf32>
    %16 = math.tanh %15 : vector<1x512xf32>
    %c0_11 = arith.constant 0 : index
    %c0_12 = arith.constant 0 : index
    %17 = vector.load %arg6[%c0_11, %c0_12] : memref<1x512xf32, #tpu.memory_space<vmem>>, vector<1x512xf32>
    tpu.vector_store %arg6[%c0_11, %c0_12], %16 {strides = array<i32>} : memref<1x512xf32, #tpu.memory_space<vmem>>, vector<1x512xf32>,
    return
  }
  func.func @transform_0(%arg0: i32) -> (i32, i32) {
    %c0_i32 = arith.constant 0 : i32
    %c0_i32_0 = arith.constant 0 : i32
    return %c0_i32, %arg0 : i32, i32
  }
  func.func @transform_1(%arg0: i32) -> (i32, i32) {
    %c0_i32 = arith.constant 0 : i32
    %c0_i32_0 = arith.constant 0 : i32
    %c0_i32_1 = arith.constant 0 : i32
    return %c0_i32, %c0_i32_0 : i32, i32
  }
  func.func @transform_2(%arg0: i32) -> (i32, i32) {
    %c0_i32 = arith.constant 0 : i32
    %c0_i32_0 = arith.constant 0 : i32
    %c0_i32_1 = arith.constant 0 : i32
    return %c0_i32, %c0_i32_0 : i32, i32
  }
  func.func @transform_3(%arg0: i32) -> (i32, i32) {
    %c0_i32 = arith.constant 0 : i32
    %c0_i32_0 = arith.constant 0 : i32
    %c0_i32_1 = arith.constant 0 : i32
    return %c0_i32, %c0_i32_0 : i32, i32
  }
  func.func @transform_4(%arg0: i32) -> (i32, i32) {
    %c0_i32 = arith.constant 0 : i32
    %c0_i32_0 = arith.constant 0 : i32
    %c0_i32_1 = arith.constant 0 : i32
    return %c0_i32, %c0_i32_0 : i32, i32
  }
  func.func @transform_5(%arg0: i32) -> (i32, i32) {
    %c0_i32 = arith.constant 0 : i32
    %c0_i32_0 = arith.constant 0 : i32
    return %c0_i32, %arg0 : i32, i32
  }
}

</mosaic_0001>

<llo_original>
// kernel: tpu_custom_call.1
$region0: #{tpu_custom_call.1}
  #allocation0 [shape = 'u32[]', space=smem, size = 0x4, offset = 0x4, fixed_abs, tag = 'smem constant byte address 0x4 - core index']
  #allocation1 [shape = 'u32[144,128]{1,0:T(1,128)}', space=vmem, size = 0x12000, scoped, tag = 'internal scratch']
  #allocation2 [shape = 'f32[1,1]{1,0:T(1,128)S(6)}', space=smem, size = 0x200, scoped, tag = 'scoped memory for tpu_custom_call.1']
  %s0 = inlined_call_operand.vmem [shape: f32[15,512], index: 0, kind: input, shape index: {}]
  %s1 = inlined_call_operand.vmem [shape: f32[64,15], index: 1, kind: input, shape index: {}]
  %s2 = inlined_call_operand.vmem [shape: f32[64,1], index: 2, kind: input, shape index: {}]
  %s3 = inlined_call_operand.vmem [shape: f32[64,1], index: 3, kind: input, shape index: {}]
  %s4 = inlined_call_operand.<no memory space> [shape: f32[1,1], index: 4, kind: input, shape index: {}]
  %s5 = inlined_call_operand.hbm [shape: f32[1,512], index: 5, kind: output, shape index: {}]
  %s6 = sld [smem:[#allocation0]]
  $region30: #{tpu_custom_call.1} parent=0
    _
  %s8 = ssub.s32 1, %s6
  %s9 = scalar_select 0, %s8, %s6
  %10 = sst [smem:[#allocation2]] %s4
  $region1: #{tpu_custom_call.1} parent=0
    #allocation3 [shape = 'u8[2048]{0}', space=vmem, size = 0x800, scoped, tag = 'output window, operand 0, single buffered']
    #allocation4 [shape = 's32[1]{0}', space=sflag, size = 0x4, scoped, tag = 'scoped memory for tpu_custom_call.1']
    %11 = vsyncpa [#allocation4], 0
    // Predicated region
    $region2: #{tpu_custom_call.1} parent=1 // pred_check
      _
    $region3: #{tpu_custom_call.1} parent=1 // pred_check_branch
      %13 = sbr.rel (0) target = $region5
    $region4: #{tpu_custom_call.1} parent=1 // pred_region
      _
    $region5: #{tpu_custom_call.1} parent=1 // pred_fallthru
      _
    // Predicated region
    $region6: #{tpu_custom_call.1} parent=1 // pred_check
      _
    $region7: #{tpu_custom_call.1} parent=1 // pred_check_branch
      %15 = sbr.rel (0) target = $region9
    $region8: #{tpu_custom_call.1} parent=1 // pred_region
      _
    $region9: #{tpu_custom_call.1} parent=1 // pred_fallthru
      _
    // Predicated region
    $region10: #{tpu_custom_call.1} parent=1 // pred_check
      _
    $region11: #{tpu_custom_call.1} parent=1 // pred_check_branch
      %17 = sbr.rel (0) target = $region13
    $region12: #{tpu_custom_call.1} parent=1 // pred_region
      _
    $region13: #{tpu_custom_call.1} parent=1 // pred_fallthru
      _
    // Predicated region
    $region14: #{tpu_custom_call.1} parent=1 // pred_check
      _
    $region15: #{tpu_custom_call.1} parent=1 // pred_check_branch
      %19 = sbr.rel (0) target = $region17
    $region16: #{tpu_custom_call.1} parent=1 // pred_region
      _
    $region17: #{tpu_custom_call.1} parent=1 // pred_fallthru
      _
    // Predicated region
    $region18: #{tpu_custom_call.1} parent=1 // pred_check
      _
    $region19: #{tpu_custom_call.1} parent=1 // pred_check_branch
      %21 = sbr.rel (0) target = $region21
    $region20: #{tpu_custom_call.1} parent=1 // pred_region
      _
    $region21: #{tpu_custom_call.1} parent=1 // pred_fallthru
      _
    %v22 = vld [vmem:[%s1] sm:$0xff]
    %v23 = vld [vmem:[%s1 + $0x8] sm:$0xff]
    %v24 = vld [vmem:[%s1 + $0x10] sm:$0xff]
    %v25 = vld [vmem:[%s1 + $0x18] sm:$0xff]
    %v26 = vld [vmem:[%s1 + $0x20] sm:$0xff]
    %v27 = vld [vmem:[%s1 + $0x28] sm:$0xff]
    %v28 = vld [vmem:[%s1 + $0x30] sm:$0xff]
    %v29 = vld [vmem:[%s1 + $0x38] sm:$0xff]
    %v30 = vld [vmem:[%s0] sm:$0xff]
    %v31 = vld [vmem:[%s0 + $0x8] sm:$0xff]
    %v32 = vld [vmem:[%s0 + $0x10] sm:$0xff]
    %v33 = vld [vmem:[%s0 + $0x18] sm:$0xff]
    %v34 = vld [vmem:[%s0 + $0x20] sm:$0x7f]
    %v35 = vld [vmem:[%s0 + $0x28] sm:$0x7f]
    %v36 = vld [vmem:[%s0 + $0x30] sm:$0x7f]
    %v37 = vld [vmem:[%s0 + $0x38] sm:$0x7f]
    %v38 = vld [vmem:[%s2] sm:$0xff]
    %v39 = vld [vmem:[%s2 + $0x8] sm:$0xff]
    %v40 = vld [vmem:[%s2 + $0x10] sm:$0xff]
    %v41 = vld [vmem:[%s2 + $0x18] sm:$0xff]
    %v42 = vld [vmem:[%s2 + $0x20] sm:$0xff]
    %v43 = vld [vmem:[%s2 + $0x28] sm:$0xff]
    %v44 = vld [vmem:[%s2 + $0x30] sm:$0xff]
    %v45 = vld [vmem:[%s2 + $0x38] sm:$0xff]
    %47 = vset.pattern.permute.xlu0 0
    %48 = vperm.xlu0 %47, %v38
    %v49 = vpop.permute.xlu0 %48
    %52 = vset.pattern.permute.xlu0 0
    %53 = vperm.xlu0 %52, %v39
    %v54 = vpop.permute.xlu0 %53
    %57 = vset.pattern.permute.xlu0 0
    %58 = vperm.xlu0 %57, %v40
    %v59 = vpop.permute.xlu0 %58
    %62 = vset.pattern.permute.xlu0 0
    %63 = vperm.xlu0 %62, %v41
    %v64 = vpop.permute.xlu0 %63
    %67 = vset.pattern.permute.xlu0 0
    %68 = vperm.xlu0 %67, %v42
    %v69 = vpop.permute.xlu0 %68
    %72 = vset.pattern.permute.xlu0 0
    %73 = vperm.xlu0 %72, %v43
    %v74 = vpop.permute.xlu0 %73
    %77 = vset.pattern.permute.xlu0 0
    %78 = vperm.xlu0 %77, %v44
    %v79 = vpop.permute.xlu0 %78
    %82 = vset.pattern.permute.xlu0 0
    %83 = vperm.xlu0 %82, %v45
    %v84 = vpop.permute.xlu0 %83
    %vm86 = vcmask 121856
    %v88 = vsel %vm86, %v22, 0
    %v91 = vsel %vm86, %v23, 0
    %v94 = vsel %vm86, %v24, 0
    %v97 = vsel %vm86, %v25, 0
    %v100 = vsel %vm86, %v26, 0
    %v103 = vsel %vm86, %v27, 0
    %v106 = vsel %vm86, %v28, 0
    %v109 = vsel %vm86, %v29, 0
    %vm111 = vcmask 1046528
    %v113 = vsel %vm111, %v34, 0
    %v116 = vsel %vm111, %v35, 0
    %v119 = vsel %vm111, %v36, 0
    %v122 = vsel %vm111, %v37, 0
    %124 = vmatprep.subr.mxu0 %v31
    %125 = vmatpush1.msra.mxu0 %v30
    %126 = vmatprep.subr.mxu0 %v116
    %127 = vmatpush1.msra.mxu0 %v113
    %128 = vmatprep.subr.mxu0 0.0
    %129 = vmatpush1.msra.mxu0 0.0
    %130 = vmatprep.subr.mxu0 0.0
    %131 = vmatpush1.msra.mxu0 0.0
    %132 = vmatprep.subr.mxu0 0.0
    %133 = vmatpush1.msra.mxu0 0.0
    %134 = vmatprep.subr.mxu0 0.0
    %135 = vmatpush1.msra.mxu0 0.0
    %136 = vmatprep.subr.mxu0 0.0
    %137 = vmatpush1.msra.mxu0 0.0
    %138 = vmatprep.subr.mxu0 0.0
    %139 = vmatpush1.msra.mxu0 0.0
    %140 = vmatprep.subr.mxu0 0.0
    %141 = vmatpush1.msra.mxu0 0.0
    %142 = vmatprep.subr.mxu0 0.0
    %143 = vmatpush1.msra.mxu0 0.0
    %144 = vmatprep.subr.mxu0 0.0
    %145 = vmatpush1.msra.mxu0 0.0
    %146 = vmatprep.subr.mxu0 0.0
    %147 = vmatpush1.msra.mxu0 0.0
    %148 = vmatprep.subr.mxu0 0.0
    %149 = vmatpush1.msra.mxu0 0.0
    %150 = vmatprep.subr.mxu0 0.0
    %151 = vmatpush1.msra.mxu0 0.0
    %152 = vmatprep.subr.mxu0 0.0
    %153 = vmatpush1.msra.mxu0 0.0
    %154 = vmatprep.subr.mxu0 0.0
    %155 = vmatpush1.msra.mxu0 0.0
    %156 = vmatprep.subr.mxu0 0.0
    %157 = vmatpush1.msra.mxu0 0.0
    %158 = vmatprep.subr.mxu0 0.0
    %159 = vmatpush1.msra.mxu0 0.0
    %160 = vmatprep.subr.mxu0 0.0
    %161 = vmatpush1.msra.mxu0 0.0
    %162 = vmatprep.subr.mxu0 0.0
    %163 = vmatpush1.msra.mxu0 0.0
    %164 = vmatprep.subr.mxu0 0.0
    %165 = vmatpush1.msra.mxu0 0.0
    %166 = vmatprep.subr.mxu0 0.0
    %167 = vmatpush1.msra.mxu0 0.0
    %168 = vmatprep.subr.mxu0 0.0
    %169 = vmatpush1.msra.mxu0 0.0
    %170 = vmatprep.subr.mxu0 0.0
    %171 = vmatpush1.msra.mxu0 0.0
    %172 = vmatprep.subr.mxu0 0.0
    %173 = vmatpush1.msra.mxu0 0.0
    %174 = vmatprep.subr.mxu0 0.0
    %175 = vmatpush1.msra.mxu0 0.0
    %176 = vmatprep.subr.mxu0 0.0
    %177 = vmatpush1.msra.mxu0 0.0
    %178 = vmatprep.subr.mxu0 0.0
    %179 = vmatpush1.msra.mxu0 0.0
    %180 = vmatprep.subr.mxu0 0.0
    %181 = vmatpush1.msra.mxu0 0.0
    %182 = vmatprep.subr.mxu0 0.0
    %183 = vmatpush1.msra.mxu0 0.0
    %184 = vmatprep.subr.mxu0 0.0
    %185 = vmatpush1.msra.mxu0 0.0
    %186 = vmatprep.subr.mxu0 0.0
    %187 = vmatpush1.msra.mxu0 0.0
    %188 = vmatprep.mubr.f32.mxu0 0.0
    %189 = vmatmul.mubr.f32.gmra.mrb[0].mxu0 %v88
    %v190 = vpop.f32.mrb[0].mxu0
    %v191 = vadd.f32 %v49, %v190
    %v192 = vpop.f32.mrb[0].mxu0
    %v193 = vadd.f32 %v49, %v192
    %194 = vmatprep.mubr.f32.mxu0 0.0
    %195 = vmatmul.mubr.f32.gmra.mrb[0].mxu0 %v91
    %v196 = vpop.f32.mrb[0].mxu0
    %v197 = vadd.f32 %v54, %v196
    %v198 = vpop.f32.mrb[0].mxu0
    %v199 = vadd.f32 %v54, %v198
    %200 = vmatprep.mubr.f32.mxu0 0.0
    %201 = vmatmul.mubr.f32.gmra.mrb[0].mxu0 %v94
    %v202 = vpop.f32.mrb[0].mxu0
    %v203 = vadd.f32 %v59, %v202
    %v204 = vpop.f32.mrb[0].mxu0
    %v205 = vadd.f32 %v59, %v204
    %206 = vmatprep.mubr.f32.mxu0 0.0
    %207 = vmatmul.mubr.f32.gmra.mrb[0].mxu0 %v97
    %v208 = vpop.f32.mrb[0].mxu0
    %v209 = vadd.f32 %v64, %v208
    %v210 = vpop.f32.mrb[0].mxu0
    %v211 = vadd.f32 %v64, %v210
    %212 = vmatprep.mubr.f32.mxu0 0.0
    %213 = vmatmul.mubr.f32.gmra.mrb[0].mxu0 %v100
    %v214 = vpop.f32.mrb[0].mxu0
    %v215 = vadd.f32 %v69, %v214
    %v216 = vpop.f32.mrb[0].mxu0
    %v217 = vadd.f32 %v69, %v216
    %218 = vmatprep.mubr.f32.mxu0 0.0
    %219 = vmatmul.mubr.f32.gmra.mrb[0].mxu0 %v103
    %v220 = vpop.f32.mrb[0].mxu0
    %v221 = vadd.f32 %v74, %v220
    %v222 = vpop.f32.mrb[0].mxu0
    %v223 = vadd.f32 %v74, %v222
    %224 = vmatprep.mubr.f32.mxu0 0.0
    %225 = vmatmul.mubr.f32.gmra.mrb[0].mxu0 %v106
    %v226 = vpop.f32.mrb[0].mxu0
    %v227 = vadd.f32 %v79, %v226
    %v228 = vpop.f32.mrb[0].mxu0
    %v229 = vadd.f32 %v79, %v228
    %230 = vmatprep.mubr.f32.mxu0 0.0
    %231 = vmatmul.mubr.f32.gmra.mrb[0].mxu0 %v109
    %v232 = vpop.f32.mrb[0].mxu0
    %v233 = vadd.f32 %v84, %v232
    %v234 = vpop.f32.mrb[0].mxu0
    %v235 = vadd.f32 %v84, %v234
    %236 = vdwg.mxu0
    %237 = vmatprep.subr.mxu0 %v33
    %238 = vmatpush1.msra.mxu0 %v32
    %239 = vmatprep.subr.mxu0 %v122
    %240 = vmatpush1.msra.mxu0 %v119
    %241 = vmatprep.subr.mxu0 0.0
    %242 = vmatpush1.msra.mxu0 0.0
    %243 = vmatprep.subr.mxu0 0.0
    %244 = vmatpush1.msra.mxu0 0.0
    %245 = vmatprep.subr.mxu0 0.0
    %246 = vmatpush1.msra.mxu0 0.0
    %247 = vmatprep.subr.mxu0 0.0
    %248 = vmatpush1.msra.mxu0 0.0
    %249 = vmatprep.subr.mxu0 0.0
    %250 = vmatpush1.msra.mxu0 0.0
    %251 = vmatprep.subr.mxu0 0.0
    %252 = vmatpush1.msra.mxu0 0.0
    %253 = vmatprep.subr.mxu0 0.0
    %254 = vmatpush1.msra.mxu0 0.0
    %255 = vmatprep.subr.mxu0 0.0
    %256 = vmatpush1.msra.mxu0 0.0
    %257 = vmatprep.subr.mxu0 0.0
    %258 = vmatpush1.msra.mxu0 0.0
    %259 = vmatprep.subr.mxu0 0.0
    %260 = vmatpush1.msra.mxu0 0.0
    %261 = vmatprep.subr.mxu0 0.0
    %262 = vmatpush1.msra.mxu0 0.0
    %263 = vmatprep.subr.mxu0 0.0
    %264 = vmatpush1.msra.mxu0 0.0
    %265 = vmatprep.subr.mxu0 0.0
    %266 = vmatpush1.msra.mxu0 0.0
    %267 = vmatprep.subr.mxu0 0.0
    %268 = vmatpush1.msra.mxu0 0.0
    %269 = vmatprep.subr.mxu0 0.0
    %270 = vmatpush1.msra.mxu0 0.0
    %271 = vmatprep.subr.mxu0 0.0
    %272 = vmatpush1.msra.mxu0 0.0
    %273 = vmatprep.subr.mxu0 0.0
    %274 = vmatpush1.msra.mxu0 0.0
    %275 = vmatprep.subr.mxu0 0.0
    %276 = vmatpush1.msra.mxu0 0.0
    %277 = vmatprep.subr.mxu0 0.0
    %278 = vmatpush1.msra.mxu0 0.0
    %279 = vmatprep.subr.mxu0 0.0
    %280 = vmatpush1.msra.mxu0 0.0
    %281 = vmatprep.subr.mxu0 0.0
    %282 = vmatpush1.msra.mxu0 0.0
    %283 = vmatprep.subr.mxu0 0.0
    %284 = vmatpush1.msra.mxu0 0.0
    %285 = vmatprep.subr.mxu0 0.0
    %286 = vmatpush1.msra.mxu0 0.0
    %287 = vmatprep.subr.mxu0 0.0
    %288 = vmatpush1.msra.mxu0 0.0
    %289 = vmatprep.subr.mxu0 0.0
    %290 = vmatpush1.msra.mxu0 0.0
    %291 = vmatprep.subr.mxu0 0.0
    %292 = vmatpush1.msra.mxu0 0.0
    %293 = vmatprep.subr.mxu0 0.0
    %294 = vmatpush1.msra.mxu0 0.0
    %295 = vmatprep.subr.mxu0 0.0
    %296 = vmatpush1.msra.mxu0 0.0
    %297 = vmatprep.subr.mxu0 0.0
    %298 = vmatpush1.msra.mxu0 0.0
    %299 = vmatprep.subr.mxu0 0.0
    %300 = vmatpush1.msra.mxu0 0.0
    %301 = vmatprep.mubr.f32.mxu0 0.0
    %302 = vmatmul.mubr.f32.gmra.mrb[0].mxu0 %v88
    %v303 = vpop.f32.mrb[0].mxu0
    %v304 = vadd.f32 %v49, %v303
    %v305 = vpop.f32.mrb[0].mxu0
    %v306 = vadd.f32 %v49, %v305
    %307 = vmatprep.mubr.f32.mxu0 0.0
    %308 = vmatmul.mubr.f32.gmra.mrb[0].mxu0 %v91
    %v309 = vpop.f32.mrb[0].mxu0
    %v310 = vadd.f32 %v54, %v309
    %v311 = vpop.f32.mrb[0].mxu0
    %v312 = vadd.f32 %v54, %v311
    %313 = vmatprep.mubr.f32.mxu0 0.0
    %314 = vmatmul.mubr.f32.gmra.mrb[0].mxu0 %v94
    %v315 = vpop.f32.mrb[0].mxu0
    %v316 = vadd.f32 %v59, %v315
    %v317 = vpop.f32.mrb[0].mxu0
    %v318 = vadd.f32 %v59, %v317
    %319 = vmatprep.mubr.f32.mxu0 0.0
    %320 = vmatmul.mubr.f32.gmra.mrb[0].mxu0 %v97
    %v321 = vpop.f32.mrb[0].mxu0
    %v322 = vadd.f32 %v64, %v321
    %v323 = vpop.f32.mrb[0].mxu0
    %v324 = vadd.f32 %v64, %v323
    %325 = vmatprep.mubr.f32.mxu0 0.0
    %326 = vmatmul.mubr.f32.gmra.mrb[0].mxu0 %v100
    %v327 = vpop.f32.mrb[0].mxu0
    %v328 = vadd.f32 %v69, %v327
    %v329 = vpop.f32.mrb[0].mxu0
    %v330 = vadd.f32 %v69, %v329
    %331 = vmatprep.mubr.f32.mxu0 0.0
    %332 = vmatmul.mubr.f32.gmra.mrb[0].mxu0 %v103
    %v333 = vpop.f32.mrb[0].mxu0
    %v334 = vadd.f32 %v74, %v333
    %v335 = vpop.f32.mrb[0].mxu0
    %v336 = vadd.f32 %v74, %v335
    %337 = vmatprep.mubr.f32.mxu0 0.0
    %338 = vmatmul.mubr.f32.gmra.mrb[0].mxu0 %v106
    %v339 = vpop.f32.mrb[0].mxu0
    %v340 = vadd.f32 %v79, %v339
    %v341 = vpop.f32.mrb[0].mxu0
    %v342 = vadd.f32 %v79, %v341
    %343 = vmatprep.mubr.f32.mxu0 0.0
    %344 = vmatmul.mubr.f32.gmra.mrb[0].mxu0 %v109
    %v345 = vpop.f32.mrb[0].mxu0
    %v346 = vadd.f32 %v84, %v345
    %v347 = vpop.f32.mrb[0].mxu0
    %v348 = vadd.f32 %v84, %v347
    %349 = vdwg.mxu0
    %v350 = vmax.f32 %v191, 0.0
    %v351 = vmax.f32 %v193, 0.0
    %v352 = vmax.f32 %v304, 0.0
    %v353 = vmax.f32 %v306, 0.0
    %v354 = vmax.f32 %v197, 0.0
    %v355 = vmax.f32 %v199, 0.0
    %v356 = vmax.f32 %v310, 0.0
    %v357 = vmax.f32 %v312, 0.0
    %v358 = vmax.f32 %v203, 0.0
    %v359 = vmax.f32 %v205, 0.0
    %v360 = vmax.f32 %v316, 0.0
    %v361 = vmax.f32 %v318, 0.0
    %v362 = vmax.f32 %v209, 0.0
    %v363 = vmax.f32 %v211, 0.0
    %v364 = vmax.f32 %v322, 0.0
    %v365 = vmax.f32 %v324, 0.0
    %v366 = vmax.f32 %v215, 0.0
    %v367 = vmax.f32 %v217, 0.0
    %v368 = vmax.f32 %v328, 0.0
    %v369 = vmax.f32 %v330, 0.0
    %v370 = vmax.f32 %v221, 0.0
    %v371 = vmax.f32 %v223, 0.0
    %v372 = vmax.f32 %v334, 0.0
    %v373 = vmax.f32 %v336, 0.0
    %v374 = vmax.f32 %v227, 0.0
    %v375 = vmax.f32 %v229, 0.0
    %v376 = vmax.f32 %v340, 0.0
    %v377 = vmax.f32 %v342, 0.0
    %v378 = vmax.f32 %v233, 0.0
    %v379 = vmax.f32 %v235, 0.0
    %v380 = vmax.f32 %v346, 0.0
    %v381 = vmax.f32 %v348, 0.0
    %v382 = vld [vmem:[%s3] sm:$0xff]
    %v383 = vld [vmem:[%s3 + $0x8] sm:$0xff]
    %v384 = vld [vmem:[%s3 + $0x10] sm:$0xff]
    %v385 = vld [vmem:[%s3 + $0x18] sm:$0xff]
    %v386 = vld [vmem:[%s3 + $0x20] sm:$0xff]
    %v387 = vld [vmem:[%s3 + $0x28] sm:$0xff]
    %v388 = vld [vmem:[%s3 + $0x30] sm:$0xff]
    %v389 = vld [vmem:[%s3 + $0x38] sm:$0xff]
    %391 = vset.pattern.permute.xlu0 0
    %392 = vperm.xlu0 %391, %v382
    %v393 = vpop.permute.xlu0 %392
    %396 = vset.pattern.permute.xlu0 0
    %397 = vperm.xlu0 %396, %v383
    %v398 = vpop.permute.xlu0 %397
    %401 = vset.pattern.permute.xlu0 0
    %402 = vperm.xlu0 %401, %v384
    %v403 = vpop.permute.xlu0 %402
    %406 = vset.pattern.permute.xlu0 0
    %407 = vperm.xlu0 %406, %v385
    %v408 = vpop.permute.xlu0 %407
    %411 = vset.pattern.permute.xlu0 0
    %412 = vperm.xlu0 %411, %v386
    %v413 = vpop.permute.xlu0 %412
    %416 = vset.pattern.permute.xlu0 0
    %417 = vperm.xlu0 %416, %v387
    %v418 = vpop.permute.xlu0 %417
    %421 = vset.pattern.permute.xlu0 0
    %422 = vperm.xlu0 %421, %v388
    %v423 = vpop.permute.xlu0 %422
    %426 = vset.pattern.permute.xlu0 0
    %427 = vperm.xlu0 %426, %v389
    %v428 = vpop.permute.xlu0 %427
    %v430 = vmul.f32 %v350, %v393
    %v431 = vmul.f32 %v351, %v393
    %v432 = vmul.f32 %v352, %v393
    %v433 = vmul.f32 %v353, %v393
    %v434 = vmul.f32 %v354, %v398
    %v435 = vmul.f32 %v355, %v398
    %v436 = vmul.f32 %v356, %v398
    %v437 = vmul.f32 %v357, %v398
    %v438 = vmul.f32 %v358, %v403
    %v439 = vmul.f32 %v359, %v403
    %v440 = vmul.f32 %v360, %v403
    %v441 = vmul.f32 %v361, %v403
    %v442 = vmul.f32 %v362, %v408
    %v443 = vmul.f32 %v363, %v408
    %v444 = vmul.f32 %v364, %v408
    %v445 = vmul.f32 %v365, %v408
    %v446 = vmul.f32 %v366, %v413
    %v447 = vmul.f32 %v367, %v413
    %v448 = vmul.f32 %v368, %v413
    %v449 = vmul.f32 %v369, %v413
    %v450 = vmul.f32 %v370, %v418
    %v451 = vmul.f32 %v371, %v418
    %v452 = vmul.f32 %v372, %v418
    %v453 = vmul.f32 %v373, %v418
    %v454 = vmul.f32 %v374, %v423
    %v455 = vmul.f32 %v375, %v423
    %v456 = vmul.f32 %v376, %v423
    %v457 = vmul.f32 %v377, %v423
    %v458 = vmul.f32 %v378, %v428
    %v459 = vmul.f32 %v379, %v428
    %v460 = vmul.f32 %v380, %v428
    %v461 = vmul.f32 %v381, %v428
    %v462 = vadd.f32 %v430, %v434
    %v463 = vadd.f32 %v462, %v438
    %v464 = vadd.f32 %v463, %v442
    %v465 = vadd.f32 %v464, %v446
    %v466 = vadd.f32 %v465, %v450
    %v467 = vadd.f32 %v466, %v454
    %v468 = vadd.f32 %v467, %v458
    %v469 = vrot.slane %v468, 4
    %v470 = vadd.f32 %v468, %v469
    %v471 = vrot.slane %v470, 2
    %v472 = vadd.f32 %v470, %v471
    %v473 = vrot.slane %v472, 1
    %v474 = vadd.f32 %v472, %v473
    %v475 = vadd.f32 %v431, %v435
    %v476 = vadd.f32 %v475, %v439
    %v477 = vadd.f32 %v476, %v443
    %v478 = vadd.f32 %v477, %v447
    %v479 = vadd.f32 %v478, %v451
    %v480 = vadd.f32 %v479, %v455
    %v481 = vadd.f32 %v480, %v459
    %v482 = vrot.slane %v481, 4
    %v483 = vadd.f32 %v481, %v482
    %v484 = vrot.slane %v483, 2
    %v485 = vadd.f32 %v483, %v484
    %v486 = vrot.slane %v485, 1
    %v487 = vadd.f32 %v485, %v486
    %v488 = vadd.f32 %v432, %v436
    %v489 = vadd.f32 %v488, %v440
    %v490 = vadd.f32 %v489, %v444
    %v491 = vadd.f32 %v490, %v448
    %v492 = vadd.f32 %v491, %v452
    %v493 = vadd.f32 %v492, %v456
    %v494 = vadd.f32 %v493, %v460
    %v495 = vrot.slane %v494, 4
    %v496 = vadd.f32 %v494, %v495
    %v497 = vrot.slane %v496, 2
    %v498 = vadd.f32 %v496, %v497
    %v499 = vrot.slane %v498, 1
    %v500 = vadd.f32 %v498, %v499
    %v501 = vadd.f32 %v433, %v437
    %v502 = vadd.f32 %v501, %v441
    %v503 = vadd.f32 %v502, %v445
    %v504 = vadd.f32 %v503, %v449
    %v505 = vadd.f32 %v504, %v453
    %v506 = vadd.f32 %v505, %v457
    %v507 = vadd.f32 %v506, %v461
    %v508 = vrot.slane %v507, 4
    %v509 = vadd.f32 %v507, %v508
    %v510 = vrot.slane %v509, 2
    %v511 = vadd.f32 %v509, %v510
    %v512 = vrot.slane %v511, 1
    %v513 = vadd.f32 %v511, %v512
    %s514 = sld [smem:[#allocation2]]
    %v515 = vstv %s514
    %v516 = vadd.f32 %v474, %v515
    %v517 = vadd.f32 %v487, %v515
    %v518 = vadd.f32 %v500, %v515
    %v519 = vadd.f32 %v513, %v515
    %v520 = vtanh.pop %v516
    %v521 = vtanh.pop %v517
    %v522 = vtanh.pop %v518
    %v523 = vtanh.pop %v519
    %v528 = vcombine.low %v520, %v521
    %v529 = vcombine.low %v522, %v523
    %v531 = vunpack.c.l.s4 1966171168
    %v532 = vunpack.c.0.s8 %v531
    %v533 = vlaneseq
    %v534 = vshrl.u32 %v533, 7
    %v535 = vsub.s32 %v532, %v534
    %v536 = vrot.slane %v528, %v535
    %v538 = vunpack.c.l.s4 1966171168
    %v539 = vunpack.c.0.s8 %v538
    %v540 = vlaneseq
    %v541 = vshrl.u32 %v540, 7
    %v542 = vsub.s32 %v539, %v541
    %v543 = vrot.slane %v529, %v542
    %v544 = vcombine.low %v536, %v543
    %v546 = vunpack.c.l.s4 1966171168
    %v547 = vunpack.c.0.s8 %v546
    %v548 = vlaneseq
    %v549 = vshrl.u32 %v548, 7
    %v550 = vsub.s32 %v547, %v549
    %v551 = vrot.slane %v544, %v550
    %v553 = vlaneseq
    %vm554 = vcmp.ge.s32.totalorder %v553, 0
    %vm555 = vcmp.lt.s32.totalorder %v553, 512
    %vm556 = vmand %vm554, %vm555
    %557 = vst.msk [vmem:[#allocation3] sm:$0xf] %vm556, %v551
    // Predicated region
    $region22: #{tpu_custom_call.1} parent=1 // pred_check
      _
    $region23: #{tpu_custom_call.1} parent=1 // pred_check_branch
      %559 = sbr.rel (0) target = $region25
    $region24: #{tpu_custom_call.1} parent=1 // pred_region
      %s561 = ssub.s32 64, 64
      %562 = vsyncadd [#allocation4], %s561
      %s564 = sshll.u32 [#allocation3], 4
      %s565 = int_to_ptr.vmem [resolvable:$true] %s564
      %567 = dma.vmem_to_hbm [thread:$0]  %s565, 64, %s5, [#allocation4]
    $region25: #{tpu_custom_call.1} parent=1 // pred_fallthru
      _
    // Predicated region
    $region26: #{tpu_custom_call.1} parent=1 // pred_check
      _
    $region27: #{tpu_custom_call.1} parent=1 // pred_check_branch
      %569 = sbr.rel (0) target = $region29
    $region28: #{tpu_custom_call.1} parent=1 // pred_region
      %570 = dma.done [#allocation4], 64
    $region29: #{tpu_custom_call.1} parent=1 // pred_fallthru
      _
    %571 = vsyncpa [#allocation4], 1

</llo_original>
